<compile_context>
chip_gen: v6e
topology: v6e:2x2x1
jax: 0.10.0
libtpu: 0.0.40
codegen_flags: <defaults>
</compile_context>

<pallas_src>
import math
import jax
import jax.numpy as jnp
from jax import lax
from jax.experimental import pallas as pl
from jax.experimental.pallas import tpu as pltpu


# --------------------------------- utilities ---------------------------------

def _vmem_limit_bytes():
    try:
        cap = pltpu.get_tpu_info().vmem_capacity_bytes
    except Exception:
        cap = 128 * 1024 * 1024
    # ~96 MiB on 128-MiB parts (v5e/v6e), ~48 MiB on 64-MiB parts (v7x).
    return int(min(cap * 3 // 4, 96 * 1024 * 1024))


def _pick_row_tile(n):
    for t in (512, 256, 128, 64, 32, 16, 8):
        if n % t == 0:
            return t
    return n  # full extent (exempt from the (8,128) rule)


def _pick_col_tile(n):
    for t in (1024, 512, 256, 128):
        if n % t == 0:
            return t
    return n  # full extent


def _pick_k_tile(k):
    for t in (1024, 512, 256, 128):
        if k % t == 0:
            return t
    return k  # full extent


# --------------------------- linear projection kernel ---------------------------

def _linear_kernel(x_ref, wT_ref, b_ref, o_ref):
    # y = x @ W^T + b.  Matmul in bf16 on the MXU, f32 accumulate, f32 bias add.
    acc = jnp.dot(x_ref[...].astype(jnp.bfloat16),
                  wT_ref[...].astype(jnp.bfloat16),
                  preferred_element_type=jnp.float32)
    o_ref[...] = (acc + b_ref[...]).astype(o_ref.dtype)


def pallas_linear(x2d, wT, b, out_dtype=jnp.float32):
    """x2d: (N, E_in); wT: (E_in, E_out) (torch weight pre-transposed); b: (E_out,)."""
    n, e_in = x2d.shape
    e_out = wT.shape[1]
    tr = _pick_row_tile(n)
    tc = _pick_col_tile(e_out)
    out_isz = jnp.dtype(out_dtype).itemsize
    return pl.pallas_call(
        _linear_kernel,
        out_shape=jax.ShapeDtypeStruct((n, e_out), out_dtype),
        grid=(n // tr, e_out // tc),
        in_specs=[pl.BlockSpec((tr, e_in), lambda i, j: (i, 0)),
                  pl.BlockSpec((e_in, tc), lambda i, j: (0, j)),
                  pl.BlockSpec((1, tc), lambda i, j: (0, j))],
        out_specs=pl.BlockSpec((tr, tc), lambda i, j: (i, j)),
        compiler_params=pltpu.CompilerParams(
            dimension_semantics=("parallel", "parallel"),
            vmem_limit_bytes=_vmem_limit_bytes()),
        cost_estimate=pl.CostEstimate(
            flops=2 * n * e_in * e_out,
            transcendentals=0,
            bytes_accessed=int(4 * (n * e_in + e_in * e_out) + out_isz * n * e_out)),
    )(x2d, wT, b.reshape(1, e_out))


def _fused_linear(x2d, w_list, b_list, out_dtype=jnp.float32):
    wT = jnp.concatenate(w_list, axis=1)
    b = jnp.concatenate(b_list, axis=0)
    return pallas_linear(x2d, wT, b, out_dtype=out_dtype)


# ------------------------------ attention kernel ------------------------------

def _make_attn_kernel(scaling, num_rel, with_mask):
    def kernel(*refs):
        if with_mask:
            relid_ref, mask_ref, q_ref, k_ref, v_ref, r_ref, o_ref, m_sc, l_sc, acc_sc = refs
        else:
            relid_ref, q_ref, k_ref, v_ref, r_ref, o_ref, m_sc, l_sc, acc_sc = refs
            mask_ref = None

        kk = pl.program_id(2)

        @pl.when(kk == 0)
        def _():
            m_sc[...] = jnp.full_like(m_sc, -jnp.inf)
            l_sc[...] = jnp.zeros_like(l_sc)
            acc_sc[...] = jnp.zeros_like(acc_sc)

        # 1/sqrt(D) folded into q once per step (also scales the RPE for free).
        q = q_ref[...] * scaling                 # (Q, D)  bf16
        k = k_ref[...]                           # (TK, D) bf16
        v = v_ref[...]                           # (TK, D) bf16
        rtab = r_ref[...]                        # (R, D)  bf16
        rel = relid_ref[...]                     # (Q, TK) int32

        # bf16 MXU matmuls with f32 accumulation; last-dim contraction (no .T).
        s = lax.dot_general(q, k, (((1,), (1,)), ((), ())),
                            preferred_element_type=jnp.float32)      # (Q, TK)
        qr = lax.dot_general(q, rtab, (((1,), (1,)), ((), ())),
                             preferred_element_type=jnp.float32)     # (Q, R)

        # Shaw-style RPE: rpe[q, k] = qr[q, rel[q, k]], gathered via a pure
        # select chain over the small static rel vocabulary (rel ids are
        # mutually exclusive, so no accumulation is needed).
        rpe = qr[:, 0:1]
        for ridx in range(1, num_rel):
            rpe = jnp.where(rel == ridx, qr[:, ridx:ridx + 1], rpe)
        s = s + rpe
        if with_mask:
            s = s + mask_ref[...]

        # Online (flash) softmax accumulation in f32.
        m_prev = m_sc[...]
        m_new = jnp.maximum(m_prev, jnp.max(s, axis=-1, keepdims=True))
        alpha = jnp.exp(m_prev - m_new)
        p = jnp.exp(s - m_new)
        l_sc[...] = alpha * l_sc[...] + jnp.sum(p, axis=-1, keepdims=True)
        acc_sc[...] = alpha * acc_sc[...] + lax.dot_general(
            p.astype(jnp.bfloat16), v, (((1,), (0,)), ((), ())),
            preferred_element_type=jnp.float32)
        m_sc[...] = m_new

        @pl.when(kk == pl.num_programs(2) - 1)
        def _():
            # Deferred normalization on the (Q, D) accumulator; exact reciprocal.
            inv = pl.reciprocal(l_sc[...], approx=False)
            o_ref[...] = (acc_sc[...] * inv).astype(o_ref.dtype)

    return kernel


def pallas_attention(q, k, v, r, rel_ids, mask, scaling):
    """q: (B,H,Q,D) bf16; k, v: (B,H,K,D) bf16; r: (H,R,D) bf16;
    rel_ids: (Q,K) int32 shared over batch/heads; mask: (Q,K) additive f32 or None.
    Returns (B, H, Q, D) float32."""
    B, H, Q, D = q.shape
    K = k.shape[2]
    R = r.shape[1]
    with_mask = mask is not None

    TK = _pick_k_tile(K)
    nk = K // TK

    inputs = [rel_ids]
    in_specs = [pl.BlockSpec((Q, TK), lambda b, h, kk: (0, kk))]
    if with_mask:
        inputs.append(mask)
        in_specs.append(pl.BlockSpec((Q, TK), lambda b, h, kk: (0, kk)))
    inputs += [q, k, v, r]
    in_specs += [
        pl.BlockSpec((None, None, Q, D), lambda b, h, kk: (b, h, 0, 0)),
        pl.BlockSpec((None, None, TK, D), lambda b, h, kk: (b, h, kk, 0)),
        pl.BlockSpec((None, None, TK, D), lambda b, h, kk: (b, h, kk, 0)),
        pl.BlockSpec((None, R, D), lambda b, h, kk: (h, 0, 0)),
    ]

    bytes_accessed = (2 * (q.size + k.size + v.size + r.size)
                      + 4 * rel_ids.size + 4 * B * H * Q * D)
    if with_mask:
        bytes_accessed += 4 * mask.size

    return pl.pallas_call(
        _make_attn_kernel(scaling, R, with_mask),
        out_shape=jax.ShapeDtypeStruct((B, H, Q, D), jnp.float32),
        grid=(B, H, nk),
        in_specs=in_specs,
        out_specs=pl.BlockSpec((None, None, Q, D), lambda b, h, kk: (b, h, 0, 0)),
        scratch_shapes=[pltpu.VMEM((Q, 1), jnp.float32),   # m (running max)
                        pltpu.VMEM((Q, 1), jnp.float32),   # l (running denom)
                        pltpu.VMEM((Q, D), jnp.float32)],  # acc (unnormalized out)
        compiler_params=pltpu.CompilerParams(
            dimension_semantics=("parallel", "parallel", "arbitrary"),
            vmem_limit_bytes=_vmem_limit_bytes()),
        cost_estimate=pl.CostEstimate(
            flops=2 * B * H * Q * D * (2 * K + R),
            transcendentals=B * H * Q * (K + 2),
            bytes_accessed=int(bytes_accessed)),
    )(*inputs)


# ------------------------------ glue / parameters ------------------------------

def sinusoid_embedding_with_padding(max_pos, dim):
    num = max_pos + 1
    half = dim // 2
    scale = math.log(10000.0) / max(half - 1, 1)
    freqs = jnp.exp(jnp.arange(half, dtype=jnp.float32) * -scale)
    pos = jnp.arange(num, dtype=jnp.float32)[:, None] * freqs[None, :]
    emb = jnp.concatenate([jnp.sin(pos), jnp.cos(pos)], axis=1)
    if emb.shape[1] < dim:
        emb = jnp.concatenate(
            [emb, jnp.zeros((num, dim - emb.shape[1]), jnp.float32)], axis=1)
    emb = emb.at[0].set(0.0)  # padding idx 0
    return emb


def init_params(key, embed_dim):
    e = embed_dim

    def xavier(k, gain):
        bound = gain * math.sqrt(6.0 / (e + e))
        # stored pre-transposed: (E_in, E_out)
        return jax.random.uniform(k, (e, e), jnp.float32, -bound, bound)

    def bias(k):
        bound = 1.0 / math.sqrt(e)
        return jax.random.uniform(k, (e,), jnp.float32, -bound, bound)

    names_half = ['sum_q', 'reg_q', 'sum_k', 'reg_k', 'sum_v', 'reg_v',
                  'sum_key2', 'sum_value2', 'key_rel0']
    names_one = ['sum_out', 'reg_out']
    keys = jax.random.split(key, 2 * len(names_half) + len(names_one))
    params = {}
    i = 0
    for n in names_half:
        params[n + '_w'] = xavier(keys[i], 1.0 / math.sqrt(2.0)); i += 1
        params[n + '_b'] = bias(keys[i]); i += 1
    for n in names_one:
        params[n + '_w'] = xavier(keys[i], 1.0); i += 1
        params[n + '_b'] = jnp.zeros((e,), jnp.float32)  # reset_parameters: out bias = 0
    return params


def sum_then_reg_rpe_self_attention(x, params, rel_embedding, rel_ids, attn_mask,
                                    sum_len, reg_len, num_heads):
    """Forward pass.  x: (S, B, E); returns (attn (S, B, E), None)."""
    S, B, E = x.shape
    assert sum_len + reg_len == S
    H = num_heads
    D = E // H
    scaling = D ** -0.5

    x_sum = x[:sum_len].reshape(sum_len * B, E)
    x_reg = x[sum_len:].reshape(reg_len * B, E)

    # ---- fused bi q/k/v projections: one (E, 3E) matmul per segment, bf16 out ----
    def qkv_proj(x2d, tag, seg_len):
        y = _fused_linear(
            x2d,
            [params[f'{tag}_q_w'], params[f'{tag}_k_w'], params[f'{tag}_v_w']],
            [params[f'{tag}_q_b'], params[f'{tag}_k_b'], params[f'{tag}_v_b']],
            out_dtype=jnp.bfloat16)                       # (seg_len*B, 3E)
        y = y.reshape(seg_len, B, 3, H, D)
        q = jnp.transpose(y[:, :, 0], (1, 2, 0, 3))       # (B, H, seg_len, D)
        k = jnp.transpose(y[:, :, 1], (1, 2, 0, 3))
        v = jnp.transpose(y[:, :, 2], (1, 2, 0, 3))
        return q, k, v

    q_sum, k_sum, v_sum = qkv_proj(x_sum, 'sum', sum_len)   # add_global_rel_bias=False
    q_reg, k_reg, v_reg = qkv_proj(x_reg, 'reg', reg_len)

    k_all = jnp.concatenate([k_sum, k_reg], axis=2)          # (B, H, S, D)
    v_all = jnp.concatenate([v_sum, v_reg], axis=2)

    # ---- do_r_proj: project the full rel-embedding table (rows never referenced
    # by rel_ids are simply unused -> identical to prefix selection) ----
    r = pallas_linear(rel_embedding, params['key_rel0_w'], params['key_rel0_b'],
                      out_dtype=jnp.bfloat16)
    R = r.shape[0]
    r = jnp.transpose(r.reshape(R, H, D), (1, 0, 2))          # (H, R, D) contiguous per head

    # rel-id tables shared across batch and heads
    ids_sum = jnp.concatenate([rel_ids['ss'], rel_ids['sr']], axis=1).astype(jnp.int32)
    ids_reg = jnp.concatenate([rel_ids['rs'], rel_ids['rr']], axis=1).astype(jnp.int32)
    mask_sum, mask_reg = attn_mask     # (sum_len,S)/None and (reg_len,S)/None additive

    # ---- summary-token attention over all keys ----
    sum_attn = pallas_attention(q_sum, k_all, v_all, r, ids_sum, mask_sum, scaling)
    sum_attn_rows = jnp.transpose(sum_attn, (0, 2, 1, 3)).reshape(B * sum_len, E)

    # ---- fused sum_key2 / sum_value2 / sum_out projections (read sum_attn once) ----
    y2 = _fused_linear(
        sum_attn_rows,
        [params['sum_key2_w'], params['sum_value2_w'], params['sum_out_w']],
        [params['sum_key2_b'], params['sum_value2_b'], params['sum_out_b']],
        out_dtype=jnp.float32)                                # (B*sum_len, 3E)
    y2 = y2.reshape(B, sum_len, 3, H, D)
    sum_key = jnp.transpose(y2[:, :, 0], (0, 2, 1, 3)).astype(jnp.bfloat16)   # (B,H,sum_len,D)
    sum_value = jnp.transpose(y2[:, :, 1], (0, 2, 1, 3)).astype(jnp.bfloat16)
    out_sum = y2[:, :, 2].reshape(B, sum_len, E)              # f32 (final output piece)

    k_cat = jnp.concatenate([sum_key, k_reg], axis=2)         # (B, H, S, D)
    v_cat = jnp.concatenate([sum_value, v_reg], axis=2)

    # ---- regular-token attention: keys/values = [sum_key2/value2, reg k/v] ----
    reg_attn = pallas_attention(q_reg, k_cat, v_cat, r, ids_reg, mask_reg, scaling)
    reg_attn_rows = jnp.transpose(reg_attn, (0, 2, 1, 3)).reshape(B * reg_len, E)
    out_reg = pallas_linear(reg_attn_rows, params['reg_out_w'], params['reg_out_b'],
                            out_dtype=jnp.float32).reshape(B, reg_len, E)

    attn = jnp.concatenate([out_sum, out_reg], axis=1)        # (B, S, E)
    attn = jnp.transpose(attn, (1, 0, 2))                     # (S, B, E)
    # TODO(synk): need_weights / need_head_weights path raises NotImplementedError in
    # the reference module as well, so it is not implemented here.
    return attn, None


# ------------------------------ pure-JAX reference ------------------------------

def _reference_forward(x, params, rel_embedding, rel_ids, attn_mask,
                       sum_len, reg_len, num_heads):
    S, B, E = x.shape
    H = num_heads
    D = E // H
    scaling = D ** -0.5

    def lin(x2, w, b):
        return x2 @ w + b

    def bi(name_sum, name_reg):
        ys = lin(x[:sum_len].reshape(-1, E), params[name_sum + '_w'], params[name_sum + '_b'])
        yr = lin(x[sum_len:].reshape(-1, E), params[name_reg + '_w'], params[name_reg + '_b'])
        return jnp.concatenate([ys.reshape(sum_len, B, H, D),
                                yr.reshape(reg_len, B, H, D)], axis=0)

    q = bi('sum_q', 'reg_q')
    k = bi('sum_k', 'reg_k')
    v = bi('sum_v', 'reg_v')
    r = lin(rel_embedding, params['key_rel0_w'], params['key_rel0_b']).reshape(-1, H, D)

    ids_sum = jnp.concatenate([rel_ids['ss'], rel_ids['sr']], axis=1)
    ids_reg = jnp.concatenate([rel_ids['rs'], rel_ids['rr']], axis=1)

    def attend(qq, kk, vv, ids, mask):
        s = jnp.einsum('qbhd,kbhd->bhqk', qq, kk)
        rg = r[ids]                                       # (Q, K, H, D)
        rpe = jnp.einsum('qbhd,qkhd->bhqk', qq, rg)
        s = (s + rpe) * scaling
        if mask is not None:
            s = s + mask[None, None]
        p = jax.nn.softmax(s.astype(jnp.float32), axis=-1)
        o = jnp.einsum('bhqk,kbhd->qbhd', p, vv)
        return o.reshape(qq.shape[0], B, E)

    sum_attn = attend(q[:sum_len], k, v, ids_sum, attn_mask[0])       # (sum_len, B, E)
    sum_key = lin(sum_attn.reshape(-1, E), params['sum_key2_w'],
                  params['sum_key2_b']).reshape(sum_len, B, H, D)
    sum_value = lin(sum_attn.reshape(-1, E), params['sum_value2_w'],
                    params['sum_value2_b']).reshape(sum_len, B, H, D)
    k2 = jnp.concatenate([sum_key, k[sum_len:]], axis=0)
    v2 = jnp.concatenate([sum_value, v[sum_len:]], axis=0)
    reg_attn = attend(q[sum_len:], k2, v2, ids_reg, attn_mask[1])     # (reg_len, B, E)

    out_sum = lin(sum_attn.reshape(-1, E), params['sum_out_w'],
                  params['sum_out_b']).reshape(sum_len, B, E)
    out_reg = lin(reg_attn.reshape(-1, E), params['reg_out_w'],
                  params['reg_out_b']).reshape(reg_len, B, E)
    return jnp.concatenate([out_sum, out_reg], axis=0)


# ----------------------------------- main -----------------------------------

if __name__ == "__main__":
    # Small deterministic config
    embed_dim = 32
    num_heads = 4
    sum_len, reg_len = 4, 12
    S = sum_len + reg_len
    B = 2
    P = 16   # rel_max_positions[0]; rel_dims[0] = embed_dim

    root = jax.random.PRNGKey(0)
    k_x, k_p = jax.random.split(root)
    x = jax.random.normal(k_x, (S, B, embed_dim), jnp.float32)

    params = init_params(k_p, embed_dim)
    rel_embedding = sinusoid_embedding_with_padding(P, embed_dim)   # (P+1, E), row0 = pad

    # Relative-position id tables (ids in [1, P], 0 reserved for padding)
    def make_ids(qlen, klen):
        qpos = jnp.arange(qlen)[:, None]
        kpos = jnp.arange(klen)[None, :]
        return (jnp.minimum(jnp.abs(qpos - kpos), P - 1) + 1).astype(jnp.int32)

    rel_ids = {'ss': make_ids(sum_len, sum_len),
               'sr': make_ids(sum_len, reg_len),
               'rs': make_ids(reg_len, sum_len),
               'rr': make_ids(reg_len, reg_len)}

    # Additive attention masks, shared across batch and heads:
    #  - summary queries see everything -> no mask input at all (all zeros)
    #  - regular queries see all summary keys + causal over regular keys
    kpos = jnp.arange(S)[None, :]
    qpos = jnp.arange(reg_len)[:, None]
    allow = (kpos < sum_len) | ((kpos - sum_len) <= qpos)
    mask_reg = jnp.where(allow, 0.0, -1e9).astype(jnp.float32)      # (reg_len, S)
    attn_mask = (None, mask_reg)

    out, _ = sum_then_reg_rpe_self_attention(
        x, params, rel_embedding, rel_ids, attn_mask, sum_len, reg_len, num_heads)
    out = jax.block_until_ready(out)
    assert out.shape == (S, B, embed_dim)
    assert bool(jnp.all(jnp.isfinite(out)))

    # Cross-check against a pure-JAX f32 reference (tolerance covers bf16 matmuls).
    ref = _reference_forward(x, params, rel_embedding, rel_ids, attn_mask,
                             sum_len, reg_len, num_heads)
    assert bool(jnp.allclose(out, ref, rtol=3e-2, atol=3e-2)), "mismatch vs reference"

    print("KERNEL_OK")
</pallas_src>

<mosaic_0001>
module attributes {stable_mosaic.version = 11 : i64} {
  func.func @_linear_kernel(%arg0: i32, %arg1: i32, %arg2: memref<8x32xf32, #tpu.memory_space<vmem>>, %arg3: memref<32x96xf32, #tpu.memory_space<vmem>>, %arg4: memref<1x96xf32, #tpu.memory_space<vmem>>, %arg5: memref<8x96xbf16, #tpu.memory_space<vmem>>) attributes {dimension_semantics = [#tpu.dimension_semantics<parallel>, #tpu.dimension_semantics<parallel>], iteration_bounds = array<i64: 1, 1>, scalar_prefetch = 0 : i64, scratch_operands = 0 : i64, tpu.core_type = #tpu.core_type<tc>, window_params = [{transform_indices = @transform_0, window_bounds = array<i64: 8, 32>}, {transform_indices = @transform_1, window_bounds = array<i64: 32, 96>}, {transform_indices = @transform_2, window_bounds = array<i64: 1, 96>}, {transform_indices = @transform_3, window_bounds = array<i64: 8, 96>}]} {
    %c0 = arith.constant 0 : index
    %c0_0 = arith.constant 0 : index
    %0 = vector.load %arg2[%c0, %c0_0] : memref<8x32xf32, #tpu.memory_space<vmem>>, vector<8x32xf32>
    %1 = arith.truncf %0 : vector<8x32xf32> to vector<8x32xbf16>
    %c0_1 = arith.constant 0 : index
    %c0_2 = arith.constant 0 : index
    %2 = vector.load %arg3[%c0_1, %c0_2] : memref<32x96xf32, #tpu.memory_space<vmem>>, vector<32x96xf32>
    %3 = arith.truncf %2 : vector<32x96xf32> to vector<32x96xbf16>
    %cst = arith.constant dense<0.000000e+00> : vector<8x96xf32>
    %4 = tpu.matmul %1, %3, %cst {dimension_numbers = #tpu.dot_dimension_numbers<[1], [0], [0], [1], [0, 0, 1, 1], [], []>} : vector<8x32xbf16>, vector<32x96xbf16>, vector<8x96xf32> -> vector<8x96xf32>
    %c0_3 = arith.constant 0 : index
    %c0_4 = arith.constant 0 : index
    %5 = vector.load %arg4[%c0_3, %c0_4] : memref<1x96xf32, #tpu.memory_space<vmem>>, vector<1x96xf32>
    %6 = vector.broadcast %5 : vector<1x96xf32> to vector<8x96xf32>
    %7 = arith.addf %4, %6 : vector<8x96xf32>
    %8 = arith.truncf %7 : vector<8x96xf32> to vector<8x96xbf16>
    %c0_5 = arith.constant 0 : index
    %c0_6 = arith.constant 0 : index
    %9 = vector.load %arg5[%c0_5, %c0_6] : memref<8x96xbf16, #tpu.memory_space<vmem>>, vector<8x96xbf16>
    tpu.vector_store %arg5[%c0_5, %c0_6], %8 {strides = array<i32>} : memref<8x96xbf16, #tpu.memory_space<vmem>>, vector<8x96xbf16>,
    return
  }
  func.func @transform_0(%arg0: i32, %arg1: i32) -> (i32, i32) {
    %c0_i32 = arith.constant 0 : i32
    %c0_i32_0 = arith.constant 0 : i32
    return %arg0, %c0_i32 : i32, i32
  }
  func.func @transform_1(%arg0: i32, %arg1: i32) -> (i32, i32) {
    %c0_i32 = arith.constant 0 : i32
    %c0_i32_0 = arith.constant 0 : i32
    return %c0_i32, %arg1 : i32, i32
  }
  func.func @transform_2(%arg0: i32, %arg1: i32) -> (i32, i32) {
    %c0_i32 = arith.constant 0 : i32
    %c0_i32_0 = arith.constant 0 : i32
    return %c0_i32, %arg1 : i32, i32
  }
  func.func @transform_3(%arg0: i32, %arg1: i32) -> (i32, i32) {
    %c0_i32 = arith.constant 0 : i32
    return %arg0, %arg1 : i32, i32
  }
}

</mosaic_0001>

<llo_original>
// kernel: tpu_custom_call.1
$region0: #{tpu_custom_call.1}
  #allocation0 [shape = 'u32[]', space=smem, size = 0x4, offset = 0x4, fixed_abs, tag = 'smem constant byte address 0x4 - core index']
  #allocation1 [shape = 'u32[144,128]{1,0:T(1,128)}', space=vmem, size = 0x12000, scoped, tag = 'internal scratch']
  %s0 = inlined_call_operand.hbm [shape: f32[8,32], index: 0, kind: input, shape index: {}]
  %s1 = inlined_call_operand.hbm [shape: f32[32,96], index: 1, kind: input, shape index: {}]
  %s2 = inlined_call_operand.vmem [shape: f32[1,96], index: 2, kind: input, shape index: {}]
  %s3 = inlined_call_operand.hbm [shape: bf16[8,96], index: 3, kind: output, shape index: {}]
  %s4 = sld [smem:[#allocation0]]
  $region30: #{tpu_custom_call.1} parent=0
    _
  %s6 = ssub.s32 1, %s4
  %s7 = scalar_select 0, %s6, %s4
  $region1: #{tpu_custom_call.1} parent=0
    #allocation2 [shape = 'u8[4096]{0}', space=vmem, size = 0x1000, scoped, tag = 'input window, operand 0, single buffered']
    #allocation3 [shape = 's32[1]{0}', space=sflag, size = 0x4, scoped, tag = 'scoped memory for tpu_custom_call.1']
    #allocation4 [shape = 's32[1]{0}', space=sflag, size = 0x4, scoped, tag = 'scoped memory for tpu_custom_call.1']
    #allocation5 [shape = 'u8[16384]{0}', space=vmem, size = 0x4000, scoped, tag = 'input window, operand 1, single buffered']
    #allocation6 [shape = 's32[1]{0}', space=sflag, size = 0x4, scoped, tag = 'scoped memory for tpu_custom_call.1']
    #allocation7 [shape = 'u8[2048]{0}', space=vmem, size = 0x800, scoped, tag = 'output window, operand 0, single buffered']
    %8 = vsyncpa [#allocation3], 0
    %9 = vsyncpa [#allocation6], 0
    %10 = vsyncpa [#allocation4], 0
    // Predicated region
    $region2: #{tpu_custom_call.1} parent=1 // pred_check
      _
    $region3: #{tpu_custom_call.1} parent=1 // pred_check_branch
      %12 = sbr.rel (0) target = $region5
    $region4: #{tpu_custom_call.1} parent=1 // pred_region
      %s14 = ssub.s32 128, 128
      %15 = vsyncadd [#allocation3], %s14
      %s17 = sshll.u32 [#allocation2], 4
      %s18 = int_to_ptr.vmem [resolvable:$true] %s17
      %20 = dma.hbm_to_vmem [thread:$0]  %s0, 128, %s18, [#allocation3]
    $region5: #{tpu_custom_call.1} parent=1 // pred_fallthru
      _
    // Predicated region
    $region6: #{tpu_custom_call.1} parent=1 // pred_check
      _
    $region7: #{tpu_custom_call.1} parent=1 // pred_check_branch
      %22 = sbr.rel (0) target = $region9
    $region8: #{tpu_custom_call.1} parent=1 // pred_region
      %s24 = ssub.s32 512, 512
      %25 = vsyncadd [#allocation6], %s24
      %s26 = sshll.u32 [#allocation5], 4
      %s27 = int_to_ptr.vmem [resolvable:$true] %s26
      %32 = dma.hbm_to_vmem [thread:$0]  %s1, 512, %s27, [#allocation6], 128, 128, 8
    $region9: #{tpu_custom_call.1} parent=1 // pred_fallthru
      _
    // Predicated region
    $region10: #{tpu_custom_call.1} parent=1 // pred_check
      _
    $region11: #{tpu_custom_call.1} parent=1 // pred_check_branch
      %34 = sbr.rel (0) target = $region13
    $region12: #{tpu_custom_call.1} parent=1 // pred_region
      _
    $region13: #{tpu_custom_call.1} parent=1 // pred_fallthru
      _
    // Predicated region
    $region14: #{tpu_custom_call.1} parent=1 // pred_check
      _
    $region15: #{tpu_custom_call.1} parent=1 // pred_check_branch
      %36 = sbr.rel (0) target = $region17
    $region16: #{tpu_custom_call.1} parent=1 // pred_region
      %37 = dma.done [#allocation3], 128
    $region17: #{tpu_custom_call.1} parent=1 // pred_fallthru
      _
    // Predicated region
    $region18: #{tpu_custom_call.1} parent=1 // pred_check
      _
    $region19: #{tpu_custom_call.1} parent=1 // pred_check_branch
      %39 = sbr.rel (0) target = $region21
    $region20: #{tpu_custom_call.1} parent=1 // pred_region
      %40 = dma.done [#allocation6], 512
    $region21: #{tpu_custom_call.1} parent=1 // pred_fallthru
      _
    %v42 = vld [vmem:[#allocation2] sm:$0xff]
    %v43 = vpack.c.bf16 %v42, %v42
    %v44 = vld [vmem:[#allocation5] sm:$0xff]
    %v45 = vld [vmem:[#allocation5 + $0x8] sm:$0xff]
    %v46 = vld [vmem:[#allocation5 + $0x10] sm:$0xff]
    %v47 = vld [vmem:[#allocation5 + $0x18] sm:$0xff]
    %v48 = vpack.c.bf16 %v45, %v44
    %v49 = vpack.c.bf16 %v47, %v46
    %v50 = vld [vmem:[%s2] sm:$0x1]
    %v52 = vlaneseq
    %v53 = vshrl.u32 %v52, 7
    %v54 = vsub.s32 0, %v53
    %v55 = vrot.slane %v50, %v54
    %vm57 = vcmask 261120
    %v59 = vsel %vm57, %v43, 0
    %61 = vmatprep.subr.bf16.mxu0 0
    %62 = vmatpush1.bf16.msra.mxu0 0
    %63 = vmatprep.subr.bf16.mxu0 0
    %64 = vmatpush1.bf16.msra.mxu0 0
    %65 = vmatprep.subr.bf16.mxu0 0
    %66 = vmatpush1.bf16.msra.mxu0 0
    %67 = vmatprep.subr.bf16.mxu0 0
    %68 = vmatpush1.bf16.msra.mxu0 0
    %69 = vmatprep.subr.bf16.mxu0 0
    %70 = vmatpush1.bf16.msra.mxu0 0
    %71 = vmatprep.subr.bf16.mxu0 0
    %72 = vmatpush1.bf16.msra.mxu0 0
    %73 = vmatprep.subr.bf16.mxu0 0
    %74 = vmatpush1.bf16.msra.mxu0 %v49
    %75 = vmatprep.subr.bf16.mxu0 0
    %76 = vmatpush1.bf16.msra.mxu0 %v48
    %77 = vmatprep.subr.bf16.mxu0 0
    %78 = vmatpush2.bf16.msra.mxu0 0
    %79 = vmatprep.subr.bf16.mxu0 0
    %80 = vmatpush2.bf16.msra.mxu0 0
    %81 = vmatprep.subr.bf16.mxu0 0
    %82 = vmatpush2.bf16.msra.mxu0 0
    %83 = vmatprep.subr.bf16.mxu0 0
    %84 = vmatpush2.bf16.msra.mxu0 0
    %85 = vmatprep.subr.bf16.mxu0 0
    %86 = vmatpush2.bf16.msra.mxu0 0
    %87 = vmatprep.subr.bf16.mxu0 0
    %88 = vmatpush2.bf16.msra.mxu0 0
    %89 = vmatprep.subr.bf16.mxu0 0
    %90 = vmatpush2.bf16.msra.mxu0 0
    %91 = vmatprep.subr.bf16.mxu0 0
    %92 = vmatpush2.bf16.msra.mxu0 0
    %93 = vmatprep.mubr.bf16.mxu0 0
    %94 = vmatmul.mubr.bf16.gmra.mxu0 %v59
    %v95 = vpop.f32.mrf.mxu0
    %v96 = vadd.f32 %v55, %v95
    %v97 = vpop.f32.mrf.mxu0
    %v98 = vpop.f32.mrf.mxu0
    %v99 = vpop.f32.mrf.mxu0
    %100 = vdwg.mxu0
    %v101 = vpack.c.bf16 %v96, %v96
    %vm102 = vcmask 781312
    %103 = vst.msk [vmem:[#allocation7] sm:$0xf] %vm102, %v101
    // Predicated region
    $region22: #{tpu_custom_call.1} parent=1 // pred_check
      _
    $region23: #{tpu_custom_call.1} parent=1 // pred_check_branch
      %105 = sbr.rel (0) target = $region25
    $region24: #{tpu_custom_call.1} parent=1 // pred_region
      %s107 = ssub.s32 64, 64
      %108 = vsyncadd [#allocation4], %s107
      %s110 = sshll.u32 [#allocation7], 4
      %s111 = int_to_ptr.vmem [resolvable:$true] %s110
      %113 = dma.vmem_to_hbm [thread:$0]  %s111, 64, %s3, [#allocation4]
    $region25: #{tpu_custom_call.1} parent=1 // pred_fallthru
      _
    // Predicated region
    $region26: #{tpu_custom_call.1} parent=1 // pred_check
      _
    $region27: #{tpu_custom_call.1} parent=1 // pred_check_branch
      %115 = sbr.rel (0) target = $region29
    $region28: #{tpu_custom_call.1} parent=1 // pred_region
      %116 = dma.done [#allocation4], 64
    $region29: #{tpu_custom_call.1} parent=1 // pred_fallthru
      _
    %117 = vsyncpa [#allocation3], 1
    %118 = vsyncpa [#allocation6], 1
    %119 = vsyncpa [#allocation4], 1

</llo_original>
